<compile_context>
chip_gen: v7x
topology: tpu7x:2x2x1
jax: 0.10.0
libtpu: 0.0.40
codegen_flags: <defaults>
</compile_context>

<pallas_src>
import functools

import jax
import jax.numpy as jnp
import numpy as np
from jax.experimental import pallas as pl
from jax.experimental.pallas import tpu as pltpu


# ---------------------------------------------------------------------------
# Pallas kernel: tiled matmul fused with per-channel shift (+ LeakyReLU)
# ---------------------------------------------------------------------------
def _cnn_block_kernel(p_ref, w_ref, shift_ref, o_ref, acc_ref, *, apply_act):
    # p_ref:     [tm, tk]   im2col patch tile (bf16 or f32)
    # w_ref:     [tk, tn]   conv weight tile (BN scale pre-folded)
    # shift_ref: [1,  tn]   f32 per-channel shift (beta - mean*scale, or bias)
    # o_ref:     [tm, tn]   output tile
    # acc_ref:   [tm, tn]   f32 accumulator scratch (persists across K steps)
    @pl.when(pl.program_id(2) == 0)
    def _():
        acc_ref[...] = jnp.zeros_like(acc_ref)

    acc_ref[...] += jnp.dot(p_ref[...], w_ref[...],
                            preferred_element_type=jnp.float32)

    @pl.when(pl.program_id(2) == pl.num_programs(2) - 1)
    def _():
        y = acc_ref[...] + shift_ref[...]
        if apply_act:
            y = jnp.maximum(y, 0.1 * y)        # LeakyReLU(0.1)
        o_ref[...] = y.astype(o_ref.dtype)


# ---------------------------------------------------------------------------
# Helpers
# ---------------------------------------------------------------------------
def _round_up(x, m):
    return ((x + m - 1) // m) * m


def _default_tiles():
    """(tm, tn, tk) sized for the smallest VMEM budget; 128-lane N on v5e."""
    try:
        kind = jax.devices()[0].device_kind.lower()
    except Exception:
        kind = ""
    if "v5 lite" in kind or "v5e" in kind or "v5litepod" in kind:
        return 512, 128, 512            # 128-wide N tiles match 4x128x128 MXU
    return 512, 256, 512                # v6e / v7x: 256-wide MXU lanes


def _im2col(x_nchw, kh, kw, stride, padding):
    """Returns patches [N*Ho*Wo, KH*KW*C1] plus (N, Ho, Wo)."""
    n, c1, h, w = x_nchw.shape
    ho = (h + 2 * padding - kh) // stride + 1
    wo = (w + 2 * padding - kw) // stride + 1
    x_nhwc = jnp.transpose(x_nchw, (0, 2, 3, 1))
    x_pad = jnp.pad(x_nhwc, ((0, 0), (padding, padding), (padding, padding), (0, 0)))
    cols = []
    for dh in range(kh):
        for dw in range(kw):
            sl = x_pad[:, dh:dh + stride * (ho - 1) + 1:stride,
                          dw:dw + stride * (wo - 1) + 1:stride, :]
            cols.append(sl)
    patches = jnp.concatenate(cols, axis=-1)            # [N, Ho, Wo, KH*KW*C1]
    patches = patches.reshape(n * ho * wo, kh * kw * c1)
    return patches, (n, ho, wo)


def _tiled_fused_matmul(patches, w2d, shift, out_dtype, apply_act):
    """out[m, c2] = epilogue(patches @ w2d + shift), tiled over (M, C2, K)."""
    m, k = patches.shape
    _, c2 = w2d.shape

    tm, tn, tk = _default_tiles()
    tm = min(tm, _round_up(m, 8))
    tk = min(tk, _round_up(k, 128))
    tn = min(tn, _round_up(c2, 128))

    m_p = _round_up(m, tm)
    k_p = _round_up(k, tk)
    c2_p = _round_up(c2, tn)

    if (m_p, k_p) != (m, k):
        patches = jnp.pad(patches, ((0, m_p - m), (0, k_p - k)))
    if (k_p, c2_p) != (k, c2):
        w2d = jnp.pad(w2d, ((0, k_p - k), (0, c2_p - c2)))
    if c2_p != c2:
        shift = jnp.pad(shift, ((0, 0), (0, c2_p - c2)))

    grid = (m_p // tm, c2_p // tn, k_p // tk)

    cost = pl.CostEstimate(
        flops=2 * m_p * k_p * c2_p,
        transcendentals=0,
        bytes_accessed=(patches.size * patches.dtype.itemsize
                        + w2d.size * w2d.dtype.itemsize
                        + shift.size * shift.dtype.itemsize
                        + m_p * c2_p * jnp.dtype(out_dtype).itemsize),
    )

    out = pl.pallas_call(
        functools.partial(_cnn_block_kernel, apply_act=apply_act),
        out_shape=jax.ShapeDtypeStruct((m_p, c2_p), out_dtype),
        grid_spec=pltpu.PrefetchScalarGridSpec(
            num_scalar_prefetch=0,
            grid=grid,
            in_specs=[
                # patches: varies with (i, k); weight/shift independent of i
                # so their VMEM tiles stay resident across the M loop.
                pl.BlockSpec((tm, tk), lambda i, j, kk: (i, kk)),
                pl.BlockSpec((tk, tn), lambda i, j, kk: (kk, j)),
                pl.BlockSpec((1, tn), lambda i, j, kk: (0, j)),
            ],
            out_specs=pl.BlockSpec((tm, tn), lambda i, j, kk: (i, j)),
            scratch_shapes=[pltpu.VMEM((tm, tn), jnp.float32)],
        ),
        compiler_params=pltpu.CompilerParams(
            dimension_semantics=("parallel", "parallel", "arbitrary"),
            vmem_limit_bytes=32 * 1024 * 1024,
        ),
        cost_estimate=cost,
    )(patches, w2d, shift)

    return out[:m, :c2]


# ---------------------------------------------------------------------------
# Public wrapper
# ---------------------------------------------------------------------------
@functools.partial(jax.jit,
                   static_argnames=("bn_act", "stride", "padding", "use_bf16"))
def cnn_block(x, weight, conv_bias, gamma, beta, running_mean, running_var,
              *, bn_act=True, stride=1, padding=1, eps=1e-5, use_bf16=True):
    c2, c1, kh, kw = weight.shape
    patches, (n, ho, wo) = _im2col(x, kh, kw, stride, padding)
    m, k = patches.shape

    # PyTorch weight [C2, C1, KH, KW] -> [KH, KW, C1, C2] -> [KH*KW*C1, C2]
    # (matches the (dh, dw, c) patch ordering in _im2col).
    w2d = jnp.transpose(weight, (2, 3, 1, 0)).reshape(k, c2).astype(jnp.float32)

    if bn_act:
        scale = gamma.astype(jnp.float32) / jnp.sqrt(
            running_var.astype(jnp.float32) + eps)
        shift = (beta.astype(jnp.float32)
                 - running_mean.astype(jnp.float32) * scale).reshape(1, c2)
        w2d = w2d * scale[None, :]          # fold BN scale into the weight
        apply_act = True
    else:
        shift = conv_bias.reshape(1, c2).astype(jnp.float32)
        apply_act = False

    if use_bf16:
        patches = patches.astype(jnp.bfloat16)
        w2d = w2d.astype(jnp.bfloat16)

    out2d = _tiled_fused_matmul(patches, w2d, shift, x.dtype, apply_act)

    out = out2d.reshape(n, ho, wo, c2)
    # TODO(synk): keep NHWC between CNNBlocks; transpose kept only to preserve
    # the PyTorch NCHW external contract.
    return jnp.transpose(out, (0, 3, 1, 2))


# ---------------------------------------------------------------------------
# Pure-JAX reference (for correctness check)
# ---------------------------------------------------------------------------
def _reference(x, weight, conv_bias, gamma, beta, mean, var,
               bn_act, stride, padding, eps=1e-5):
    y = jax.lax.conv_general_dilated(
        x, weight, window_strides=(stride, stride),
        padding=((padding, padding), (padding, padding)),
        dimension_numbers=("NCHW", "OIHW", "NCHW"))
    if bn_act:
        s = gamma / jnp.sqrt(var + eps)
        y = y * s[None, :, None, None] + (beta - mean * s)[None, :, None, None]
        y = jnp.where(y > 0, y, 0.1 * y)
    else:
        y = y + conv_bias[None, :, None, None]
    return y


# ---------------------------------------------------------------------------
# Deterministic setup + smoke test
# ---------------------------------------------------------------------------
if __name__ == "__main__":
    key = jax.random.PRNGKey(0)
    k_x, k_w, k_b, k_g, k_be, k_m, k_v = jax.random.split(key, 7)

    N, C1, H, W = 2, 4, 16, 16
    C2, KH, KW = 8, 3, 3          # kwargs: kernel_size=3, stride=1, padding=1

    x = jax.random.normal(k_x, (N, C1, H, W), dtype=jnp.float32)
    weight = jax.random.normal(k_w, (C2, C1, KH, KW), dtype=jnp.float32) * 0.1
    conv_bias = jax.random.normal(k_b, (C2,), dtype=jnp.float32) * 0.1
    gamma = jax.random.normal(k_g, (C2,), dtype=jnp.float32) * 0.1 + 1.0
    beta = jax.random.normal(k_be, (C2,), dtype=jnp.float32) * 0.1
    running_mean = jax.random.normal(k_m, (C2,), dtype=jnp.float32) * 0.1
    running_var = jax.random.uniform(k_v, (C2,), dtype=jnp.float32,
                                     minval=0.5, maxval=1.5)

    # bn_act=True path (conv + BN + LeakyReLU)
    y = cnn_block(x, weight, conv_bias, gamma, beta, running_mean, running_var,
                  bn_act=True, stride=1, padding=1)
    jax.block_until_ready(y)
    assert y.shape == (N, C2, H, W), y.shape
    y_ref = _reference(x, weight, conv_bias, gamma, beta, running_mean,
                       running_var, True, 1, 1)
    np.testing.assert_allclose(np.asarray(y), np.asarray(y_ref),
                               atol=5e-2, rtol=5e-2)

    # bn_act=False path (pure conv + bias)
    y2 = cnn_block(x, weight, conv_bias, gamma, beta, running_mean, running_var,
                   bn_act=False, stride=1, padding=1)
    jax.block_until_ready(y2)
    assert y2.shape == (N, C2, H, W), y2.shape
    y2_ref = _reference(x, weight, conv_bias, gamma, beta, running_mean,
                        running_var, False, 1, 1)
    np.testing.assert_allclose(np.asarray(y2), np.asarray(y2_ref),
                               atol=5e-2, rtol=5e-2)

    print("KERNEL_OK")
</pallas_src>

<mosaic_0001>
module attributes {stable_mosaic.version = 11 : i64} {
  func.func @_cnn_block_kernel(%arg0: i32, %arg1: i32, %arg2: i32, %arg3: memref<512x128xbf16, #tpu.memory_space<vmem>>, %arg4: memref<128x128xbf16, #tpu.memory_space<vmem>>, %arg5: memref<1x128xf32, #tpu.memory_space<vmem>>, %arg6: memref<512x128xf32, #tpu.memory_space<vmem>>, %arg7: memref<512x128xf32, #tpu.memory_space<vmem>>) attributes {dimension_semantics = [#tpu.dimension_semantics<parallel>, #tpu.dimension_semantics<parallel>, #tpu.dimension_semantics<arbitrary>], iteration_bounds = array<i64: 1, 1, 1>, scalar_prefetch = 0 : i64, scratch_operands = 1 : i64, tpu.core_type = #tpu.core_type<tc>, window_params = [{transform_indices = @transform_0, window_bounds = array<i64: 512, 128>}, {transform_indices = @transform_1, window_bounds = array<i64: 128, 128>}, {transform_indices = @transform_2, window_bounds = array<i64: 1, 128>}, {transform_indices = @transform_3, window_bounds = array<i64: 512, 128>}]} {
    %c0_i32 = arith.constant 0 : i32
    %0 = arith.cmpi eq, %arg2, %c0_i32 : i32
    %1 = arith.extui %0 : i1 to i32
    %c0_i32_0 = arith.constant 0 : i32
    %2 = arith.cmpi ne, %1, %c0_i32_0 : i32
    scf.if %2 {
      %cst_10 = arith.constant 0.000000e+00 : f32
      %12 = vector.broadcast %cst_10 : f32 to vector<512x128xf32>
      %c0_11 = arith.constant 0 : index
      %c0_12 = arith.constant 0 : index
      %13 = vector.load %arg7[%c0_11, %c0_12] : memref<512x128xf32, #tpu.memory_space<vmem>>, vector<512x128xf32>
      tpu.vector_store %arg7[%c0_11, %c0_12], %12 {strides = array<i32>} : memref<512x128xf32, #tpu.memory_space<vmem>>, vector<512x128xf32>,
    } else {
    }
    %c0 = arith.constant 0 : index
    %c0_1 = arith.constant 0 : index
    %3 = vector.load %arg7[%c0, %c0_1] : memref<512x128xf32, #tpu.memory_space<vmem>>, vector<512x128xf32>
    %c0_2 = arith.constant 0 : index
    %c0_3 = arith.constant 0 : index
    %4 = vector.load %arg3[%c0_2, %c0_3] : memref<512x128xbf16, #tpu.memory_space<vmem>>, vector<512x128xbf16>
    %c0_4 = arith.constant 0 : index
    %c0_5 = arith.constant 0 : index
    %5 = vector.load %arg4[%c0_4, %c0_5] : memref<128x128xbf16, #tpu.memory_space<vmem>>, vector<128x128xbf16>
    %cst = arith.constant dense<0.000000e+00> : vector<512x128xf32>
    %6 = tpu.matmul %4, %5, %cst {dimension_numbers = #tpu.dot_dimension_numbers<[1], [0], [0], [1], [0, 0, 1, 1], [], []>} : vector<512x128xbf16>, vector<128x128xbf16>, vector<512x128xf32> -> vector<512x128xf32>
    %7 = arith.addf %3, %6 : vector<512x128xf32>
    %c0_6 = arith.constant 0 : index
    %c0_7 = arith.constant 0 : index
    %8 = vector.load %arg7[%c0_6, %c0_7] : memref<512x128xf32, #tpu.memory_space<vmem>>, vector<512x128xf32>
    tpu.vector_store %arg7[%c0_6, %c0_7], %7 {strides = array<i32>} : memref<512x128xf32, #tpu.memory_space<vmem>>, vector<512x128xf32>,
    %c0_i32_8 = arith.constant 0 : i32
    %9 = arith.cmpi eq, %arg2, %c0_i32_8 : i32
    %10 = arith.extui %9 : i1 to i32
    %c0_i32_9 = arith.constant 0 : i32
    %11 = arith.cmpi ne, %10, %c0_i32_9 : i32
    scf.if %11 {
      %c0_10 = arith.constant 0 : index
      %c0_11 = arith.constant 0 : index
      %12 = vector.load %arg7[%c0_10, %c0_11] : memref<512x128xf32, #tpu.memory_space<vmem>>, vector<512x128xf32>
      %c0_12 = arith.constant 0 : index
      %c0_13 = arith.constant 0 : index
      %13 = vector.load %arg5[%c0_12, %c0_13] : memref<1x128xf32, #tpu.memory_space<vmem>>, vector<1x128xf32>
      %14 = vector.broadcast %13 : vector<1x128xf32> to vector<512x128xf32>
      %15 = arith.addf %12, %14 : vector<512x128xf32>
      %cst_14 = arith.constant 1.000000e-01 : f32
      %16 = vector.broadcast %cst_14 : f32 to vector<512x128xf32>
      %17 = arith.mulf %16, %15 : vector<512x128xf32>
      %18 = arith.maximumf %15, %17 : vector<512x128xf32>
      %c0_15 = arith.constant 0 : index
      %c0_16 = arith.constant 0 : index
      %19 = vector.load %arg6[%c0_15, %c0_16] : memref<512x128xf32, #tpu.memory_space<vmem>>, vector<512x128xf32>
      tpu.vector_store %arg6[%c0_15, %c0_16], %18 {strides = array<i32>} : memref<512x128xf32, #tpu.memory_space<vmem>>, vector<512x128xf32>,
    } else {
    }
    return
  }
  func.func @transform_0(%arg0: i32, %arg1: i32, %arg2: i32) -> (i32, i32) {
    %c0_i32 = arith.constant 0 : i32
    return %arg0, %arg2 : i32, i32
  }
  func.func @transform_1(%arg0: i32, %arg1: i32, %arg2: i32) -> (i32, i32) {
    %c0_i32 = arith.constant 0 : i32
    return %arg2, %arg1 : i32, i32
  }
  func.func @transform_2(%arg0: i32, %arg1: i32, %arg2: i32) -> (i32, i32) {
    %c0_i32 = arith.constant 0 : i32
    %c0_i32_0 = arith.constant 0 : i32
    return %c0_i32, %arg1 : i32, i32
  }
  func.func @transform_3(%arg0: i32, %arg1: i32, %arg2: i32) -> (i32, i32) {
    %c0_i32 = arith.constant 0 : i32
    return %arg0, %arg1 : i32, i32
  }
}

</mosaic_0001>

<llo_original>
// kernel: cnn_block.1
$region0: #{cnn_block.1}
  #allocation0 [shape = 'u32[]', space=smem, size = 0x4, offset = 0x4, fixed_abs, tag = 'smem constant byte address 0x4 - core index']
  #allocation1 [shape = 'u32[144,128]{1,0:T(1,128)}', space=vmem, size = 0x12000, scoped, tag = 'internal scratch']
  #allocation2 [shape = 'f32[512,128]{1,0:T(8,128)}', space=vmem, size = 0x40000, scoped, tag = 'scratch operand']
  %s0 = inlined_call_operand.vmem [shape: bf16[512,128], index: 0, kind: input, shape index: {}]
  %s1 = inlined_call_operand.vmem [shape: bf16[128,128], index: 1, kind: input, shape index: {}]
  %s2 = inlined_call_operand.vmem [shape: f32[1,128], index: 2, kind: input, shape index: {}]
  %s3 = inlined_call_operand.vmem [shape: f32[512,128], index: 3, kind: output, shape index: {}]
  %s4 = sld [smem:[#allocation0]]
  $region30: #{cnn_block.1} parent=0
    _
  %s6 = ssub.s32 1, %s4
  %s7 = scalar_select 0, %s6, %s4
  // Predicated region
  $region2: #{cnn_block.1} parent=0 // pred_check
    _
  $region3: #{cnn_block.1} parent=0 // pred_check_branch
    %9 = sbr.rel (0) target = $region5
  $region4: #{cnn_block.1} parent=0 // pred_region
    _
  $region5: #{cnn_block.1} parent=0 // pred_fallthru
    _
  // Predicated region
  $region6: #{cnn_block.1} parent=0 // pred_check
    _
  $region7: #{cnn_block.1} parent=0 // pred_check_branch
    %11 = sbr.rel (0) target = $region9
  $region8: #{cnn_block.1} parent=0 // pred_region
    _
  $region9: #{cnn_block.1} parent=0 // pred_fallthru
    _
  // Predicated region
  $region10: #{cnn_block.1} parent=0 // pred_check
    _
  $region11: #{cnn_block.1} parent=0 // pred_check_branch
    %13 = sbr.rel (0) target = $region13
  $region12: #{cnn_block.1} parent=0 // pred_region
    _
  $region13: #{cnn_block.1} parent=0 // pred_fallthru
    _
  %p15 = scmp.eq.s32.totalorder 0, 0
  // Predicated region
  $region14: #{cnn_block.1} parent=0 // pred_check
    %p16 = pneg %p15
  $region15: #{cnn_block.1} parent=0 // pred_check_branch
    %18 = sbr.rel (%p16) target = $region17
  $region16: #{cnn_block.1} parent=0 // pred_region
    %19 = vst [vmem:[#allocation2] sm:$0xff] 0.0
    %20 = vst [vmem:[#allocation2 + $0x8] sm:$0xff] 0.0
    %21 = vst [vmem:[#allocation2 + $0x10] sm:$0xff] 0.0
    %22 = vst [vmem:[#allocation2 + $0x18] sm:$0xff] 0.0
    %23 = vst [vmem:[#allocation2 + $0x20] sm:$0xff] 0.0
    %24 = vst [vmem:[#allocation2 + $0x28] sm:$0xff] 0.0
    %25 = vst [vmem:[#allocation2 + $0x30] sm:$0xff] 0.0
    %26 = vst [vmem:[#allocation2 + $0x38] sm:$0xff] 0.0
    %27 = vst [vmem:[#allocation2 + $0x40] sm:$0xff] 0.0
    %28 = vst [vmem:[#allocation2 + $0x48] sm:$0xff] 0.0
    %29 = vst [vmem:[#allocation2 + $0x50] sm:$0xff] 0.0
    %30 = vst [vmem:[#allocation2 + $0x58] sm:$0xff] 0.0
    %31 = vst [vmem:[#allocation2 + $0x60] sm:$0xff] 0.0
    %32 = vst [vmem:[#allocation2 + $0x68] sm:$0xff] 0.0
    %33 = vst [vmem:[#allocation2 + $0x70] sm:$0xff] 0.0
    %34 = vst [vmem:[#allocation2 + $0x78] sm:$0xff] 0.0
    %35 = vst [vmem:[#allocation2 + $0x80] sm:$0xff] 0.0
    %36 = vst [vmem:[#allocation2 + $0x88] sm:$0xff] 0.0
    %37 = vst [vmem:[#allocation2 + $0x90] sm:$0xff] 0.0
    %38 = vst [vmem:[#allocation2 + $0x98] sm:$0xff] 0.0
    %39 = vst [vmem:[#allocation2 + $0xa0] sm:$0xff] 0.0
    %40 = vst [vmem:[#allocation2 + $0xa8] sm:$0xff] 0.0
    %41 = vst [vmem:[#allocation2 + $0xb0] sm:$0xff] 0.0
    %42 = vst [vmem:[#allocation2 + $0xb8] sm:$0xff] 0.0
    %43 = vst [vmem:[#allocation2 + $0xc0] sm:$0xff] 0.0
    %44 = vst [vmem:[#allocation2 + $0xc8] sm:$0xff] 0.0
    %45 = vst [vmem:[#allocation2 + $0xd0] sm:$0xff] 0.0
    %46 = vst [vmem:[#allocation2 + $0xd8] sm:$0xff] 0.0
    %47 = vst [vmem:[#allocation2 + $0xe0] sm:$0xff] 0.0
    %48 = vst [vmem:[#allocation2 + $0xe8] sm:$0xff] 0.0
    %49 = vst [vmem:[#allocation2 + $0xf0] sm:$0xff] 0.0
    %50 = vst [vmem:[#allocation2 + $0xf8] sm:$0xff] 0.0
    %51 = vst [vmem:[#allocation2 + $0x100] sm:$0xff] 0.0
    %52 = vst [vmem:[#allocation2 + $0x108] sm:$0xff] 0.0
    %53 = vst [vmem:[#allocation2 + $0x110] sm:$0xff] 0.0
    %54 = vst [vmem:[#allocation2 + $0x118] sm:$0xff] 0.0
    %55 = vst [vmem:[#allocation2 + $0x120] sm:$0xff] 0.0
    %56 = vst [vmem:[#allocation2 + $0x128] sm:$0xff] 0.0
    %57 = vst [vmem:[#allocation2 + $0x130] sm:$0xff] 0.0
    %58 = vst [vmem:[#allocation2 + $0x138] sm:$0xff] 0.0
    %59 = vst [vmem:[#allocation2 + $0x140] sm:$0xff] 0.0
    %60 = vst [vmem:[#allocation2 + $0x148] sm:$0xff] 0.0
    %61 = vst [vmem:[#allocation2 + $0x150] sm:$0xff] 0.0
    %62 = vst [vmem:[#allocation2 + $0x158] sm:$0xff] 0.0
    %63 = vst [vmem:[#allocation2 + $0x160] sm:$0xff] 0.0
    %64 = vst [vmem:[#allocation2 + $0x168] sm:$0xff] 0.0
    %65 = vst [vmem:[#allocation2 + $0x170] sm:$0xff] 0.0
    %66 = vst [vmem:[#allocation2 + $0x178] sm:$0xff] 0.0
    %67 = vst [vmem:[#allocation2 + $0x180] sm:$0xff] 0.0
    %68 = vst [vmem:[#allocation2 + $0x188] sm:$0xff] 0.0
    %69 = vst [vmem:[#allocation2 + $0x190] sm:$0xff] 0.0
    %70 = vst [vmem:[#allocation2 + $0x198] sm:$0xff] 0.0
    %71 = vst [vmem:[#allocation2 + $0x1a0] sm:$0xff] 0.0
    %72 = vst [vmem:[#allocation2 + $0x1a8] sm:$0xff] 0.0
    %73 = vst [vmem:[#allocation2 + $0x1b0] sm:$0xff] 0.0
    %74 = vst [vmem:[#allocation2 + $0x1b8] sm:$0xff] 0.0
    %75 = vst [vmem:[#allocation2 + $0x1c0] sm:$0xff] 0.0
    %76 = vst [vmem:[#allocation2 + $0x1c8] sm:$0xff] 0.0
    %77 = vst [vmem:[#allocation2 + $0x1d0] sm:$0xff] 0.0
    %78 = vst [vmem:[#allocation2 + $0x1d8] sm:$0xff] 0.0
    %79 = vst [vmem:[#allocation2 + $0x1e0] sm:$0xff] 0.0
    %80 = vst [vmem:[#allocation2 + $0x1e8] sm:$0xff] 0.0
    %81 = vst [vmem:[#allocation2 + $0x1f0] sm:$0xff] 0.0
    %82 = vst [vmem:[#allocation2 + $0x1f8] sm:$0xff] 0.0
  $region17: #{cnn_block.1} parent=0 // pred_fallthru
    _
  %v83 = vld [vmem:[#allocation2] sm:$0xff]
  %v84 = vld [vmem:[#allocation2 + $0x8] sm:$0xff]
  %v85 = vld [vmem:[#allocation2 + $0x10] sm:$0xff]
  %v86 = vld [vmem:[#allocation2 + $0x18] sm:$0xff]
  %v87 = vld [vmem:[#allocation2 + $0x20] sm:$0xff]
  %v88 = vld [vmem:[#allocation2 + $0x28] sm:$0xff]
  %v89 = vld [vmem:[#allocation2 + $0x30] sm:$0xff]
  %v90 = vld [vmem:[#allocation2 + $0x38] sm:$0xff]
  %v91 = vld [vmem:[#allocation2 + $0x40] sm:$0xff]
  %v92 = vld [vmem:[#allocation2 + $0x48] sm:$0xff]
  %v93 = vld [vmem:[#allocation2 + $0x50] sm:$0xff]
  %v94 = vld [vmem:[#allocation2 + $0x58] sm:$0xff]
  %v95 = vld [vmem:[#allocation2 + $0x60] sm:$0xff]
  %v96 = vld [vmem:[#allocation2 + $0x68] sm:$0xff]
  %v97 = vld [vmem:[#allocation2 + $0x70] sm:$0xff]
  %v98 = vld [vmem:[#allocation2 + $0x78] sm:$0xff]
  %v99 = vld [vmem:[#allocation2 + $0x80] sm:$0xff]
  %v100 = vld [vmem:[#allocation2 + $0x88] sm:$0xff]
  %v101 = vld [vmem:[#allocation2 + $0x90] sm:$0xff]
  %v102 = vld [vmem:[#allocation2 + $0x98] sm:$0xff]
  %v103 = vld [vmem:[#allocation2 + $0xa0] sm:$0xff]
  %v104 = vld [vmem:[#allocation2 + $0xa8] sm:$0xff]
  %v105 = vld [vmem:[#allocation2 + $0xb0] sm:$0xff]
  %v106 = vld [vmem:[#allocation2 + $0xb8] sm:$0xff]
  %v107 = vld [vmem:[#allocation2 + $0xc0] sm:$0xff]
  %v108 = vld [vmem:[#allocation2 + $0xc8] sm:$0xff]
  %v109 = vld [vmem:[#allocation2 + $0xd0] sm:$0xff]
  %v110 = vld [vmem:[#allocation2 + $0xd8] sm:$0xff]
  %v111 = vld [vmem:[#allocation2 + $0xe0] sm:$0xff]
  %v112 = vld [vmem:[#allocation2 + $0xe8] sm:$0xff]
  %v113 = vld [vmem:[#allocation2 + $0xf0] sm:$0xff]
  %v114 = vld [vmem:[#allocation2 + $0xf8] sm:$0xff]
  %v115 = vld [vmem:[#allocation2 + $0x100] sm:$0xff]
  %v116 = vld [vmem:[#allocation2 + $0x108] sm:$0xff]
  %v117 = vld [vmem:[#allocation2 + $0x110] sm:$0xff]
  %v118 = vld [vmem:[#allocation2 + $0x118] sm:$0xff]
  %v119 = vld [vmem:[#allocation2 + $0x120] sm:$0xff]
  %v120 = vld [vmem:[#allocation2 + $0x128] sm:$0xff]
  %v121 = vld [vmem:[#allocation2 + $0x130] sm:$0xff]
  %v122 = vld [vmem:[#allocation2 + $0x138] sm:$0xff]
  %v123 = vld [vmem:[#allocation2 + $0x140] sm:$0xff]
  %v124 = vld [vmem:[#allocation2 + $0x148] sm:$0xff]
  %v125 = vld [vmem:[#allocation2 + $0x150] sm:$0xff]
  %v126 = vld [vmem:[#allocation2 + $0x158] sm:$0xff]
  %v127 = vld [vmem:[#allocation2 + $0x160] sm:$0xff]
  %v128 = vld [vmem:[#allocation2 + $0x168] sm:$0xff]
  %v129 = vld [vmem:[#allocation2 + $0x170] sm:$0xff]
  %v130 = vld [vmem:[#allocation2 + $0x178] sm:$0xff]
  %v131 = vld [vmem:[#allocation2 + $0x180] sm:$0xff]
  %v132 = vld [vmem:[#allocation2 + $0x188] sm:$0xff]
  %v133 = vld [vmem:[#allocation2 + $0x190] sm:$0xff]
  %v134 = vld [vmem:[#allocation2 + $0x198] sm:$0xff]
  %v135 = vld [vmem:[#allocation2 + $0x1a0] sm:$0xff]
  %v136 = vld [vmem:[#allocation2 + $0x1a8] sm:$0xff]
  %v137 = vld [vmem:[#allocation2 + $0x1b0] sm:$0xff]
  %v138 = vld [vmem:[#allocation2 + $0x1b8] sm:$0xff]
  %v139 = vld [vmem:[#allocation2 + $0x1c0] sm:$0xff]
  %v140 = vld [vmem:[#allocation2 + $0x1c8] sm:$0xff]
  %v141 = vld [vmem:[#allocation2 + $0x1d0] sm:$0xff]
  %v142 = vld [vmem:[#allocation2 + $0x1d8] sm:$0xff]
  %v143 = vld [vmem:[#allocation2 + $0x1e0] sm:$0xff]
  %v144 = vld [vmem:[#allocation2 + $0x1e8] sm:$0xff]
  %v145 = vld [vmem:[#allocation2 + $0x1f0] sm:$0xff]
  %v146 = vld [vmem:[#allocation2 + $0x1f8] sm:$0xff]
  %v147 = vld [vmem:[%s0] sm:$0xf]
  %v148 = vld [vmem:[%s0 + $0x4] sm:$0xf]
  %v149 = vld [vmem:[%s0 + $0x8] sm:$0xf]
  %v150 = vld [vmem:[%s0 + $0xc] sm:$0xf]
  %v151 = vld [vmem:[%s0 + $0x10] sm:$0xf]
  %v152 = vld [vmem:[%s0 + $0x14] sm:$0xf]
  %v153 = vld [vmem:[%s0 + $0x18] sm:$0xf]
  %v154 = vld [vmem:[%s0 + $0x1c] sm:$0xf]
  %v155 = vld [vmem:[%s0 + $0x20] sm:$0xf]
  %v156 = vld [vmem:[%s0 + $0x24] sm:$0xf]
  %v157 = vld [vmem:[%s0 + $0x28] sm:$0xf]
  %v158 = vld [vmem:[%s0 + $0x2c] sm:$0xf]
  %v159 = vld [vmem:[%s0 + $0x30] sm:$0xf]
  %v160 = vld [vmem:[%s0 + $0x34] sm:$0xf]
  %v161 = vld [vmem:[%s0 + $0x38] sm:$0xf]
  %v162 = vld [vmem:[%s0 + $0x3c] sm:$0xf]
  %v163 = vld [vmem:[%s0 + $0x40] sm:$0xf]
  %v164 = vld [vmem:[%s0 + $0x44] sm:$0xf]
  %v165 = vld [vmem:[%s0 + $0x48] sm:$0xf]
  %v166 = vld [vmem:[%s0 + $0x4c] sm:$0xf]
  %v167 = vld [vmem:[%s0 + $0x50] sm:$0xf]
  %v168 = vld [vmem:[%s0 + $0x54] sm:$0xf]
  %v169 = vld [vmem:[%s0 + $0x58] sm:$0xf]
  %v170 = vld [vmem:[%s0 + $0x5c] sm:$0xf]
  %v171 = vld [vmem:[%s0 + $0x60] sm:$0xf]
  %v172 = vld [vmem:[%s0 + $0x64] sm:$0xf]
  %v173 = vld [vmem:[%s0 + $0x68] sm:$0xf]
  %v174 = vld [vmem:[%s0 + $0x6c] sm:$0xf]
  %v175 = vld [vmem:[%s0 + $0x70] sm:$0xf]
  %v176 = vld [vmem:[%s0 + $0x74] sm:$0xf]
  %v177 = vld [vmem:[%s0 + $0x78] sm:$0xf]
  %v178 = vld [vmem:[%s0 + $0x7c] sm:$0xf]
  %v179 = vld [vmem:[%s0 + $0x80] sm:$0xf]
  %v180 = vld [vmem:[%s0 + $0x84] sm:$0xf]
  %v181 = vld [vmem:[%s0 + $0x88] sm:$0xf]
  %v182 = vld [vmem:[%s0 + $0x8c] sm:$0xf]
  %v183 = vld [vmem:[%s0 + $0x90] sm:$0xf]
  %v184 = vld [vmem:[%s0 + $0x94] sm:$0xf]
  %v185 = vld [vmem:[%s0 + $0x98] sm:$0xf]
  %v186 = vld [vmem:[%s0 + $0x9c] sm:$0xf]
  %v187 = vld [vmem:[%s0 + $0xa0] sm:$0xf]
  %v188 = vld [vmem:[%s0 + $0xa4] sm:$0xf]
  %v189 = vld [vmem:[%s0 + $0xa8] sm:$0xf]
  %v190 = vld [vmem:[%s0 + $0xac] sm:$0xf]
  %v191 = vld [vmem:[%s0 + $0xb0] sm:$0xf]
  %v192 = vld [vmem:[%s0 + $0xb4] sm:$0xf]
  %v193 = vld [vmem:[%s0 + $0xb8] sm:$0xf]
  %v194 = vld [vmem:[%s0 + $0xbc] sm:$0xf]
  %v195 = vld [vmem:[%s0 + $0xc0] sm:$0xf]
  %v196 = vld [vmem:[%s0 + $0xc4] sm:$0xf]
  %v197 = vld [vmem:[%s0 + $0xc8] sm:$0xf]
  %v198 = vld [vmem:[%s0 + $0xcc] sm:$0xf]
  %v199 = vld [vmem:[%s0 + $0xd0] sm:$0xf]
  %v200 = vld [vmem:[%s0 + $0xd4] sm:$0xf]
  %v201 = vld [vmem:[%s0 + $0xd8] sm:$0xf]
  %v202 = vld [vmem:[%s0 + $0xdc] sm:$0xf]
  %v203 = vld [vmem:[%s0 + $0xe0] sm:$0xf]
  %v204 = vld [vmem:[%s0 + $0xe4] sm:$0xf]
  %v205 = vld [vmem:[%s0 + $0xe8] sm:$0xf]
  %v206 = vld [vmem:[%s0 + $0xec] sm:$0xf]
  %v207 = vld [vmem:[%s0 + $0xf0] sm:$0xf]
  %v208 = vld [vmem:[%s0 + $0xf4] sm:$0xf]
  %v209 = vld [vmem:[%s0 + $0xf8] sm:$0xf]
  %v210 = vld [vmem:[%s0 + $0xfc] sm:$0xf]
  %v211 = vld [vmem:[%s1] sm:$0xf]
  %v212 = vld [vmem:[%s1 + $0x4] sm:$0xf]
  %v213 = vld [vmem:[%s1 + $0x8] sm:$0xf]
  %v214 = vld [vmem:[%s1 + $0xc] sm:$0xf]
  %v215 = vld [vmem:[%s1 + $0x10] sm:$0xf]
  %v216 = vld [vmem:[%s1 + $0x14] sm:$0xf]
  %v217 = vld [vmem:[%s1 + $0x18] sm:$0xf]
  %v218 = vld [vmem:[%s1 + $0x1c] sm:$0xf]
  %v219 = vld [vmem:[%s1 + $0x20] sm:$0xf]
  %v220 = vld [vmem:[%s1 + $0x24] sm:$0xf]
  %v221 = vld [vmem:[%s1 + $0x28] sm:$0xf]
  %v222 = vld [vmem:[%s1 + $0x2c] sm:$0xf]
  %v223 = vld [vmem:[%s1 + $0x30] sm:$0xf]
  %v224 = vld [vmem:[%s1 + $0x34] sm:$0xf]
  %v225 = vld [vmem:[%s1 + $0x38] sm:$0xf]
  %v226 = vld [vmem:[%s1 + $0x3c] sm:$0xf]
  %v291 = vunpack.c.l.b16 %v147
  %v292 = vunpack.c.l.b16 %v148
  %v293 = vunpack.c.l.b16 %v149
  %v294 = vunpack.c.l.b16 %v150
  %v295 = vunpack.c.l.b16 %v151
  %v296 = vunpack.c.l.b16 %v152
  %v297 = vunpack.c.l.b16 %v153
  %v298 = vunpack.c.l.b16 %v154
  %v299 = vunpack.c.l.b16 %v155
  %v300 = vunpack.c.l.b16 %v156
  %v301 = vunpack.c.l.b16 %v157
  %v302 = vunpack.c.l.b16 %v158
  %v303 = vunpack.c.l.b16 %v159
  %v304 = vunpack.c.l.b16 %v160
  %v305 = vunpack.c.l.b16 %v161
  %v306 = vunpack.c.l.b16 %v162
  %v307 = vunpack.c.l.b16 %v163
  %v308 = vunpack.c.l.b16 %v164
  %v309 = vunpack.c.l.b16 %v165
  %v310 = vunpack.c.l.b16 %v166
  %v311 = vunpack.c.l.b16 %v167
  %v312 = vunpack.c.l.b16 %v168
  %v313 = vunpack.c.l.b16 %v169
  %v314 = vunpack.c.l.b16 %v170
  %v315 = vunpack.c.l.b16 %v171
  %v316 = vunpack.c.l.b16 %v172
  %v317 = vunpack.c.l.b16 %v173
  %v318 = vunpack.c.l.b16 %v174
  %v319 = vunpack.c.l.b16 %v175
  %v320 = vunpack.c.l.b16 %v176
  %v321 = vunpack.c.l.b16 %v177
  %v322 = vunpack.c.l.b16 %v178
  %v323 = vunpack.c.l.b16 %v179
  %v324 = vunpack.c.l.b16 %v180
  %v325 = vunpack.c.l.b16 %v181
  %v326 = vunpack.c.l.b16 %v182
  %v327 = vunpack.c.l.b16 %v183
  %v328 = vunpack.c.l.b16 %v184
  %v329 = vunpack.c.l.b16 %v185
  %v330 = vunpack.c.l.b16 %v186
  %v331 = vunpack.c.l.b16 %v187
  %v332 = vunpack.c.l.b16 %v188
  %v333 = vunpack.c.l.b16 %v189
  %v334 = vunpack.c.l.b16 %v190
  %v335 = vunpack.c.l.b16 %v191
  %v336 = vunpack.c.l.b16 %v192
  %v337 = vunpack.c.l.b16 %v193
  %v338 = vunpack.c.l.b16 %v194
  %v339 = vunpack.c.l.b16 %v195
  %v340 = vunpack.c.l.b16 %v196
  %v341 = vunpack.c.l.b16 %v197
  %v342 = vunpack.c.l.b16 %v198
  %v343 = vunpack.c.l.b16 %v199
  %v344 = vunpack.c.l.b16 %v200
  %v345 = vunpack.c.l.b16 %v201
  %v346 = vunpack.c.l.b16 %v202
  %v347 = vunpack.c.l.b16 %v203
  %v348 = vunpack.c.l.b16 %v204
  %v349 = vunpack.c.l.b16 %v205
  %v350 = vunpack.c.l.b16 %v206
  %v351 = vunpack.c.l.b16 %v207
  %v352 = vunpack.c.l.b16 %v208
  %v353 = vunpack.c.l.b16 %v209
  %v354 = vunpack.c.l.b16 %v210
  %v355 = vpack.c.b16 %v292, %v291
  %v356 = vpack.c.b16 %v294, %v293
  %v357 = vpack.c.b16 %v296, %v295
  %v358 = vpack.c.b16 %v298, %v297
  %v359 = vpack.c.b16 %v300, %v299
  %v360 = vpack.c.b16 %v302, %v301
  %v361 = vpack.c.b16 %v304, %v303
  %v362 = vpack.c.b16 %v306, %v305
  %v363 = vpack.c.b16 %v308, %v307
  %v364 = vpack.c.b16 %v310, %v309
  %v365 = vpack.c.b16 %v312, %v311
  %v366 = vpack.c.b16 %v314, %v313
  %v367 = vpack.c.b16 %v316, %v315
  %v368 = vpack.c.b16 %v318, %v317
  %v369 = vpack.c.b16 %v320, %v319
  %v370 = vpack.c.b16 %v322, %v321
  %v371 = vpack.c.b16 %v324, %v323
  %v372 = vpack.c.b16 %v326, %v325
  %v373 = vpack.c.b16 %v328, %v327
  %v374 = vpack.c.b16 %v330, %v329
  %v375 = vpack.c.b16 %v332, %v331
  %v376 = vpack.c.b16 %v334, %v333
  %v377 = vpack.c.b16 %v336, %v335
  %v378 = vpack.c.b16 %v338, %v337
  %v379 = vpack.c.b16 %v340, %v339
  %v380 = vpack.c.b16 %v342, %v341
  %v381 = vpack.c.b16 %v344, %v343
  %v382 = vpack.c.b16 %v346, %v345
  %v383 = vpack.c.b16 %v348, %v347
  %v384 = vpack.c.b16 %v350, %v349
  %v385 = vpack.c.b16 %v352, %v351
  %v386 = vpack.c.b16 %v354, %v353
  %v435 = vunpack.c.l.b16 %v211
  %v436 = vunpack.c.l.b16 %v212
  %v437 = vunpack.c.l.b16 %v213
  %v438 = vunpack.c.l.b16 %v214
  %v439 = vunpack.c.l.b16 %v215
  %v440 = vunpack.c.l.b16 %v216
  %v441 = vunpack.c.l.b16 %v217
  %v442 = vunpack.c.l.b16 %v218
  %v443 = vunpack.c.l.b16 %v219
  %v444 = vunpack.c.l.b16 %v220
  %v445 = vunpack.c.l.b16 %v221
  %v446 = vunpack.c.l.b16 %v222
  %v447 = vunpack.c.l.b16 %v223
  %v448 = vunpack.c.l.b16 %v224
  %v449 = vunpack.c.l.b16 %v225
  %v450 = vunpack.c.l.b16 %v226
  %v451 = vpack.c.b16 %v436, %v435
  %v452 = vpack.c.b16 %v438, %v437
  %v453 = vpack.c.b16 %v440, %v439
  %v454 = vpack.c.b16 %v442, %v441
  %v455 = vpack.c.b16 %v444, %v443
  %v456 = vpack.c.b16 %v446, %v445
  %v457 = vpack.c.b16 %v448, %v447
  %v458 = vpack.c.b16 %v450, %v449
  %467 = vmatprep.subr.bf16.mxu0 0
  %468 = vmatpush1.bf16.msra.mxu0 %v451
  %469 = vmatprep.subr.bf16.mxu0 0
  %470 = vmatpush1.bf16.msra.mxu0 %v452
  %471 = vmatprep.subr.bf16.mxu0 0
  %472 = vmatpush1.bf16.msra.mxu0 %v453
  %473 = vmatprep.subr.bf16.mxu0 0
  %474 = vmatpush1.bf16.msra.mxu0 %v454
  %475 = vmatprep.subr.bf16.mxu0 0
  %476 = vmatpush1.bf16.msra.mxu0 %v455
  %477 = vmatprep.subr.bf16.mxu0 0
  %478 = vmatpush1.bf16.msra.mxu0 %v456
  %479 = vmatprep.subr.bf16.mxu0 0
  %480 = vmatpush1.bf16.msra.mxu0 %v457
  %481 = vmatprep.subr.bf16.mxu0 0
  %482 = vmatpush1.bf16.msra.mxu0 %v458
  %483 = vmatprep.subr.bf16.mxu0 0
  %484 = vmatpush1.bf16.msra.mxu0 0
  %485 = vmatprep.subr.bf16.mxu0 0
  %486 = vmatpush1.bf16.msra.mxu0 0
  %487 = vmatprep.subr.bf16.mxu0 0
  %488 = vmatpush1.bf16.msra.mxu0 0
  %489 = vmatprep.subr.bf16.mxu0 0
  %490 = vmatpush1.bf16.msra.mxu0 0
  %491 = vmatprep.subr.bf16.mxu0 0
  %492 = vmatpush1.bf16.msra.mxu0 0
  %493 = vmatprep.subr.bf16.mxu0 0
  %494 = vmatpush1.bf16.msra.mxu0 0
  %495 = vmatprep.subr.bf16.mxu0 0
  %496 = vmatpush1.bf16.msra.mxu0 0
  %497 = vmatprep.subr.bf16.mxu0 0
  %498 = vmatpush1.bf16.msra.mxu0 0
  %499 = vmatprep.mubr.bf16.mxu0 0
  %500 = vmatmul.mubr.bf16.gmra.mrb[0].mxu0 %v355
  %v501 = vpop.f32.mrb[0].mxu0
  %v502 = vadd.f32 0.0, %v501
  %v503 = vpop.f32.mrb[0].mxu0
  %v504 = vpop.f32.mrb[0].mxu0
  %v505 = vadd.f32 0.0, %v504
  %v506 = vpop.f32.mrb[0].mxu0
  %507 = vmatprep.mubr.bf16.mxu0 0
  %508 = vmatmul.mubr.bf16.gmra.mrb[0].mxu0 %v356
  %v509 = vpop.f32.mrb[0].mxu0
  %v510 = vadd.f32 0.0, %v509
  %v511 = vpop.f32.mrb[0].mxu0
  %v512 = vpop.f32.mrb[0].mxu0
  %v513 = vadd.f32 0.0, %v512
  %v514 = vpop.f32.mrb[0].mxu0
  %515 = vmatprep.mubr.bf16.mxu0 0
  %516 = vmatmul.mubr.bf16.gmra.mrb[0].mxu0 %v357
  %v517 = vpop.f32.mrb[0].mxu0
  %v518 = vadd.f32 0.0, %v517
  %v519 = vpop.f32.mrb[0].mxu0
  %v520 = vpop.f32.mrb[0].mxu0
  %v521 = vadd.f32 0.0, %v520
  %v522 = vpop.f32.mrb[0].mxu0
  %523 = vmatprep.mubr.bf16.mxu0 0
  %524 = vmatmul.mubr.bf16.gmra.mrb[0].mxu0 %v358
  %v525 = vpop.f32.mrb[0].mxu0
  %v526 = vadd.f32 0.0, %v525
  %v527 = vpop.f32.mrb[0].mxu0
  %v528 = vpop.f32.mrb[0].mxu0
  %v529 = vadd.f32 0.0, %v528
  %v530 = vpop.f32.mrb[0].mxu0
  %531 = vmatprep.mubr.bf16.mxu0 0
  %532 = vmatmul.mubr.bf16.gmra.mrb[0].mxu0 %v359
  %v533 = vpop.f32.mrb[0].mxu0
  %v534 = vadd.f32 0.0, %v533
  %v535 = vpop.f32.mrb[0].mxu0
  %v536 = vpop.f32.mrb[0].mxu0
  %v537 = vadd.f32 0.0, %v536
  %v538 = vpop.f32.mrb[0].mxu0
  %539 = vmatprep.mubr.bf16.mxu0 0
  %540 = vmatmul.mubr.bf16.gmra.mrb[0].mxu0 %v360
  %v541 = vpop.f32.mrb[0].mxu0
  %v542 = vadd.f32 0.0, %v541
  %v543 = vpop.f32.mrb[0].mxu0
  %v544 = vpop.f32.mrb[0].mxu0
  %v545 = vadd.f32 0.0, %v544
  %v546 = vpop.f32.mrb[0].mxu0
  %547 = vmatprep.mubr.bf16.mxu0 0
  %548 = vmatmul.mubr.bf16.gmra.mrb[0].mxu0 %v361
  %v549 = vpop.f32.mrb[0].mxu0
  %v550 = vadd.f32 0.0, %v549
  %v551 = vpop.f32.mrb[0].mxu0
  %v552 = vpop.f32.mrb[0].mxu0
  %v553 = vadd.f32 0.0, %v552
  %v554 = vpop.f32.mrb[0].mxu0
  %555 = vmatprep.mubr.bf16.mxu0 0
  %556 = vmatmul.mubr.bf16.gmra.mrb[0].mxu0 %v362
  %v557 = vpop.f32.mrb[0].mxu0
  %v558 = vadd.f32 0.0, %v557
  %v559 = vpop.f32.mrb[0].mxu0
  %v560 = vpop.f32.mrb[0].mxu0
  %v561 = vadd.f32 0.0, %v560
  %v562 = vpop.f32.mrb[0].mxu0
  %563 = vmatprep.mubr.bf16.mxu0 0
  %564 = vmatmul.mubr.bf16.gmra.mrb[0].mxu0 %v363
  %v565 = vpop.f32.mrb[0].mxu0
  %v566 = vadd.f32 0.0, %v565
  %v567 = vpop.f32.mrb[0].mxu0
  %v568 = vpop.f32.mrb[0].mxu0
  %v569 = vadd.f32 0.0, %v568
  %v570 = vpop.f32.mrb[0].mxu0
  %571 = vmatprep.mubr.bf16.mxu0 0
  %572 = vmatmul.mubr.bf16.gmra.mrb[0].mxu0 %v364
  %v573 = vpop.f32.mrb[0].mxu0
  %v574 = vadd.f32 0.0, %v573
  %v575 = vpop.f32.mrb[0].mxu0
  %v576 = vpop.f32.mrb[0].mxu0
  %v577 = vadd.f32 0.0, %v576
  %v578 = vpop.f32.mrb[0].mxu0
  %579 = vmatprep.mubr.bf16.mxu0 0
  %580 = vmatmul.mubr.bf16.gmra.mrb[0].mxu0 %v365
  %v581 = vpop.f32.mrb[0].mxu0
  %v582 = vadd.f32 0.0, %v581
  %v583 = vpop.f32.mrb[0].mxu0
  %v584 = vpop.f32.mrb[0].mxu0
  %v585 = vadd.f32 0.0, %v584
  %v586 = vpop.f32.mrb[0].mxu0
  %587 = vmatprep.mubr.bf16.mxu0 0
  %588 = vmatmul.mubr.bf16.gmra.mrb[0].mxu0 %v366
  %v589 = vpop.f32.mrb[0].mxu0
  %v590 = vadd.f32 0.0, %v589
  %v591 = vpop.f32.mrb[0].mxu0
  %v592 = vpop.f32.mrb[0].mxu0
  %v593 = vadd.f32 0.0, %v592
  %v594 = vpop.f32.mrb[0].mxu0
  %595 = vmatprep.mubr.bf16.mxu0 0
  %596 = vmatmul.mubr.bf16.gmra.mrb[0].mxu0 %v367
  %v597 = vpop.f32.mrb[0].mxu0
  %v598 = vadd.f32 0.0, %v597
  %v599 = vpop.f32.mrb[0].mxu0
  %v600 = vpop.f32.mrb[0].mxu0
  %v601 = vadd.f32 0.0, %v600
  %v602 = vpop.f32.mrb[0].mxu0
  %603 = vmatprep.mubr.bf16.mxu0 0
  %604 = vmatmul.mubr.bf16.gmra.mrb[0].mxu0 %v368
  %v605 = vpop.f32.mrb[0].mxu0
  %v606 = vadd.f32 0.0, %v605
  %v607 = vpop.f32.mrb[0].mxu0
  %v608 = vpop.f32.mrb[0].mxu0
  %v609 = vadd.f32 0.0, %v608
  %v610 = vpop.f32.mrb[0].mxu0
  %611 = vmatprep.mubr.bf16.mxu0 0
  %612 = vmatmul.mubr.bf16.gmra.mrb[0].mxu0 %v369
  %v613 = vpop.f32.mrb[0].mxu0
  %v614 = vadd.f32 0.0, %v613
  %v615 = vpop.f32.mrb[0].mxu0
  %v616 = vpop.f32.mrb[0].mxu0
  %v617 = vadd.f32 0.0, %v616
  %v618 = vpop.f32.mrb[0].mxu0
  %619 = vmatprep.mubr.bf16.mxu0 0
  %620 = vmatmul.mubr.bf16.gmra.mrb[0].mxu0 %v370
  %v621 = vpop.f32.mrb[0].mxu0
  %v622 = vadd.f32 0.0, %v621
  %v623 = vpop.f32.mrb[0].mxu0
  %v624 = vpop.f32.mrb[0].mxu0
  %v625 = vadd.f32 0.0, %v624
  %v626 = vpop.f32.mrb[0].mxu0
  %627 = vmatprep.mubr.bf16.mxu0 0
  %628 = vmatmul.mubr.bf16.gmra.mrb[0].mxu0 %v371
  %v629 = vpop.f32.mrb[0].mxu0
  %v630 = vadd.f32 0.0, %v629
  %v631 = vpop.f32.mrb[0].mxu0
  %v632 = vpop.f32.mrb[0].mxu0
  %v633 = vadd.f32 0.0, %v632
  %v634 = vpop.f32.mrb[0].mxu0
  %635 = vmatprep.mubr.bf16.mxu0 0
  %636 = vmatmul.mubr.bf16.gmra.mrb[0].mxu0 %v372
  %v637 = vpop.f32.mrb[0].mxu0
  %v638 = vadd.f32 0.0, %v637
  %v639 = vpop.f32.mrb[0].mxu0
  %v640 = vpop.f32.mrb[0].mxu0
  %v641 = vadd.f32 0.0, %v640
  %v642 = vpop.f32.mrb[0].mxu0
  %643 = vmatprep.mubr.bf16.mxu0 0
  %644 = vmatmul.mubr.bf16.gmra.mrb[0].mxu0 %v373
  %v645 = vpop.f32.mrb[0].mxu0
  %v646 = vadd.f32 0.0, %v645
  %v647 = vpop.f32.mrb[0].mxu0
  %v648 = vpop.f32.mrb[0].mxu0
  %v649 = vadd.f32 0.0, %v648
  %v650 = vpop.f32.mrb[0].mxu0
  %651 = vmatprep.mubr.bf16.mxu0 0
  %652 = vmatmul.mubr.bf16.gmra.mrb[0].mxu0 %v374
  %v653 = vpop.f32.mrb[0].mxu0
  %v654 = vadd.f32 0.0, %v653
  %v655 = vpop.f32.mrb[0].mxu0
  %v656 = vpop.f32.mrb[0].mxu0
  %v657 = vadd.f32 0.0, %v656
  %v658 = vpop.f32.mrb[0].mxu0
  %659 = vmatprep.mubr.bf16.mxu0 0
  %660 = vmatmul.mubr.bf16.gmra.mrb[0].mxu0 %v375
  %v661 = vpop.f32.mrb[0].mxu0
  %v662 = vadd.f32 0.0, %v661
  %v663 = vpop.f32.mrb[0].mxu0
  %v664 = vpop.f32.mrb[0].mxu0
  %v665 = vadd.f32 0.0, %v664
  %v666 = vpop.f32.mrb[0].mxu0
  %667 = vmatprep.mubr.bf16.mxu0 0
  %668 = vmatmul.mubr.bf16.gmra.mrb[0].mxu0 %v376
  %v669 = vpop.f32.mrb[0].mxu0
  %v670 = vadd.f32 0.0, %v669
  %v671 = vpop.f32.mrb[0].mxu0
  %v672 = vpop.f32.mrb[0].mxu0
  %v673 = vadd.f32 0.0, %v672
  %v674 = vpop.f32.mrb[0].mxu0
  %675 = vmatprep.mubr.bf16.mxu0 0
  %676 = vmatmul.mubr.bf16.gmra.mrb[0].mxu0 %v377
  %v677 = vpop.f32.mrb[0].mxu0
  %v678 = vadd.f32 0.0, %v677
  %v679 = vpop.f32.mrb[0].mxu0
  %v680 = vpop.f32.mrb[0].mxu0
  %v681 = vadd.f32 0.0, %v680
  %v682 = vpop.f32.mrb[0].mxu0
  %683 = vmatprep.mubr.bf16.mxu0 0
  %684 = vmatmul.mubr.bf16.gmra.mrb[0].mxu0 %v378
  %v685 = vpop.f32.mrb[0].mxu0
  %v686 = vadd.f32 0.0, %v685
  %v687 = vpop.f32.mrb[0].mxu0
  %v688 = vpop.f32.mrb[0].mxu0
  %v689 = vadd.f32 0.0, %v688
  %v690 = vpop.f32.mrb[0].mxu0
  %691 = vmatprep.mubr.bf16.mxu0 0
  %692 = vmatmul.mubr.bf16.gmra.mrb[0].mxu0 %v379
  %v693 = vpop.f32.mrb[0].mxu0
  %v694 = vadd.f32 0.0, %v693
  %v695 = vpop.f32.mrb[0].mxu0
  %v696 = vpop.f32.mrb[0].mxu0
  %v697 = vadd.f32 0.0, %v696
  %v698 = vpop.f32.mrb[0].mxu0
  %699 = vmatprep.mubr.bf16.mxu0 0
  %700 = vmatmul.mubr.bf16.gmra.mrb[0].mxu0 %v380
  %v701 = vpop.f32.mrb[0].mxu0
  %v702 = vadd.f32 0.0, %v701
  %v703 = vpop.f32.mrb[0].mxu0
  %v704 = vpop.f32.mrb[0].mxu0
  %v705 = vadd.f32 0.0, %v704
  %v706 = vpop.f32.mrb[0].mxu0
  %707 = vmatprep.mubr.bf16.mxu0 0
  %708 = vmatmul.mubr.bf16.gmra.mrb[0].mxu0 %v381
  %v709 = vpop.f32.mrb[0].mxu0
  %v710 = vadd.f32 0.0, %v709
  %v711 = vpop.f32.mrb[0].mxu0
  %v712 = vpop.f32.mrb[0].mxu0
  %v713 = vadd.f32 0.0, %v712
  %v714 = vpop.f32.mrb[0].mxu0
  %715 = vmatprep.mubr.bf16.mxu0 0
  %716 = vmatmul.mubr.bf16.gmra.mrb[0].mxu0 %v382
  %v717 = vpop.f32.mrb[0].mxu0
  %v718 = vadd.f32 0.0, %v717
  %v719 = vpop.f32.mrb[0].mxu0
  %v720 = vpop.f32.mrb[0].mxu0
  %v721 = vadd.f32 0.0, %v720
  %v722 = vpop.f32.mrb[0].mxu0
  %723 = vmatprep.mubr.bf16.mxu0 0
  %724 = vmatmul.mubr.bf16.gmra.mrb[0].mxu0 %v383
  %v725 = vpop.f32.mrb[0].mxu0
  %v726 = vadd.f32 0.0, %v725
  %v727 = vpop.f32.mrb[0].mxu0
  %v728 = vpop.f32.mrb[0].mxu0
  %v729 = vadd.f32 0.0, %v728
  %v730 = vpop.f32.mrb[0].mxu0
  %731 = vmatprep.mubr.bf16.mxu0 0
  %732 = vmatmul.mubr.bf16.gmra.mrb[0].mxu0 %v384
  %v733 = vpop.f32.mrb[0].mxu0
  %v734 = vadd.f32 0.0, %v733
  %v735 = vpop.f32.mrb[0].mxu0
  %v736 = vpop.f32.mrb[0].mxu0
  %v737 = vadd.f32 0.0, %v736
  %v738 = vpop.f32.mrb[0].mxu0
  %739 = vmatprep.mubr.bf16.mxu0 0
  %740 = vmatmul.mubr.bf16.gmra.mrb[0].mxu0 %v385
  %v741 = vpop.f32.mrb[0].mxu0
  %v742 = vadd.f32 0.0, %v741
  %v743 = vpop.f32.mrb[0].mxu0
  %v744 = vpop.f32.mrb[0].mxu0
  %v745 = vadd.f32 0.0, %v744
  %v746 = vpop.f32.mrb[0].mxu0
  %747 = vmatprep.mubr.bf16.mxu0 0
  %748 = vmatmul.mubr.bf16.gmra.mrb[0].mxu0 %v386
  %v749 = vpop.f32.mrb[0].mxu0
  %v750 = vadd.f32 0.0, %v749
  %v751 = vpop.f32.mrb[0].mxu0
  %v752 = vpop.f32.mrb[0].mxu0
  %v753 = vadd.f32 0.0, %v752
  %v754 = vpop.f32.mrb[0].mxu0
  %755 = vdwg.mxu0
  %v756 = vadd.f32 %v83, %v502
  %v757 = vadd.f32 %v84, %v505
  %v758 = vadd.f32 %v85, %v510
  %v759 = vadd.f32 %v86, %v513
  %v760 = vadd.f32 %v87, %v518
  %v761 = vadd.f32 %v88, %v521
  %v762 = vadd.f32 %v89, %v526
  %v763 = vadd.f32 %v90, %v529
  %v764 = vadd.f32 %v91, %v534
  %v765 = vadd.f32 %v92, %v537
  %v766 = vadd.f32 %v93, %v542
  %v767 = vadd.f32 %v94, %v545
  %v768 = vadd.f32 %v95, %v550
  %v769 = vadd.f32 %v96, %v553
  %v770 = vadd.f32 %v97, %v558
  %v771 = vadd.f32 %v98, %v561
  %v772 = vadd.f32 %v99, %v566
  %v773 = vadd.f32 %v100, %v569
  %v774 = vadd.f32 %v101, %v574
  %v775 = vadd.f32 %v102, %v577
  %v776 = vadd.f32 %v103, %v582
  %v777 = vadd.f32 %v104, %v585
  %v778 = vadd.f32 %v105, %v590
  %v779 = vadd.f32 %v106, %v593
  %v780 = vadd.f32 %v107, %v598
  %v781 = vadd.f32 %v108, %v601
  %v782 = vadd.f32 %v109, %v606
  %v783 = vadd.f32 %v110, %v609
  %v784 = vadd.f32 %v111, %v614
  %v785 = vadd.f32 %v112, %v617
  %v786 = vadd.f32 %v113, %v622
  %v787 = vadd.f32 %v114, %v625
  %v788 = vadd.f32 %v115, %v630
  %v789 = vadd.f32 %v116, %v633
  %v790 = vadd.f32 %v117, %v638
  %v791 = vadd.f32 %v118, %v641
  %v792 = vadd.f32 %v119, %v646
  %v793 = vadd.f32 %v120, %v649
  %v794 = vadd.f32 %v121, %v654
  %v795 = vadd.f32 %v122, %v657
  %v796 = vadd.f32 %v123, %v662
  %v797 = vadd.f32 %v124, %v665
  %v798 = vadd.f32 %v125, %v670
  %v799 = vadd.f32 %v126, %v673
  %v800 = vadd.f32 %v127, %v678
  %v801 = vadd.f32 %v128, %v681
  %v802 = vadd.f32 %v129, %v686
  %v803 = vadd.f32 %v130, %v689
  %v804 = vadd.f32 %v131, %v694
  %v805 = vadd.f32 %v132, %v697
  %v806 = vadd.f32 %v133, %v702
  %v807 = vadd.f32 %v134, %v705
  %v808 = vadd.f32 %v135, %v710
  %v809 = vadd.f32 %v136, %v713
  %v810 = vadd.f32 %v137, %v718
  %v811 = vadd.f32 %v138, %v721
  %v812 = vadd.f32 %v139, %v726
  %v813 = vadd.f32 %v140, %v729
  %v814 = vadd.f32 %v141, %v734
  %v815 = vadd.f32 %v142, %v737
  %v816 = vadd.f32 %v143, %v742
  %v817 = vadd.f32 %v144, %v745
  %v818 = vadd.f32 %v145, %v750
  %v819 = vadd.f32 %v146, %v753
  %820 = vst [vmem:[#allocation2] sm:$0xff] %v756
  %821 = vst [vmem:[#allocation2 + $0x8] sm:$0xff] %v757
  %822 = vst [vmem:[#allocation2 + $0x10] sm:$0xff] %v758
  %823 = vst [vmem:[#allocation2 + $0x18] sm:$0xff] %v759
  %824 = vst [vmem:[#allocation2 + $0x20] sm:$0xff] %v760
  %825 = vst [vmem:[#allocation2 + $0x28] sm:$0xff] %v761
  %826 = vst [vmem:[#allocation2 + $0x30] sm:$0xff] %v762
  %827 = vst [vmem:[#allocation2 + $0x38] sm:$0xff] %v763
  %828 = vst [vmem:[#allocation2 + $0x40] sm:$0xff] %v764
  %829 = vst [vmem:[#allocation2 + $0x48] sm:$0xff] %v765
  %830 = vst [vmem:[#allocation2 + $0x50] sm:$0xff] %v766
  %831 = vst [vmem:[#allocation2 + $0x58] sm:$0xff] %v767
  %832 = vst [vmem:[#allocation2 + $0x60] sm:$0xff] %v768
  %833 = vst [vmem:[#allocation2 + $0x68] sm:$0xff] %v769
  %834 = vst [vmem:[#allocation2 + $0x70] sm:$0xff] %v770
  %835 = vst [vmem:[#allocation2 + $0x78] sm:$0xff] %v771
  %836 = vst [vmem:[#allocation2 + $0x80] sm:$0xff] %v772
  %837 = vst [vmem:[#allocation2 + $0x88] sm:$0xff] %v773
  %838 = vst [vmem:[#allocation2 + $0x90] sm:$0xff] %v774
  %839 = vst [vmem:[#allocation2 + $0x98] sm:$0xff] %v775
  %840 = vst [vmem:[#allocation2 + $0xa0] sm:$0xff] %v776
  %841 = vst [vmem:[#allocation2 + $0xa8] sm:$0xff] %v777
  %842 = vst [vmem:[#allocation2 + $0xb0] sm:$0xff] %v778
  %843 = vst [vmem:[#allocation2 + $0xb8] sm:$0xff] %v779
  %844 = vst [vmem:[#allocation2 + $0xc0] sm:$0xff] %v780
  %845 = vst [vmem:[#allocation2 + $0xc8] sm:$0xff] %v781
  %846 = vst [vmem:[#allocation2 + $0xd0] sm:$0xff] %v782
  %847 = vst [vmem:[#allocation2 + $0xd8] sm:$0xff] %v783
  %848 = vst [vmem:[#allocation2 + $0xe0] sm:$0xff] %v784
  %849 = vst [vmem:[#allocation2 + $0xe8] sm:$0xff] %v785
  %850 = vst [vmem:[#allocation2 + $0xf0] sm:$0xff] %v786
  %851 = vst [vmem:[#allocation2 + $0xf8] sm:$0xff] %v787
  %852 = vst [vmem:[#allocation2 + $0x100] sm:$0xff] %v788
  %853 = vst [vmem:[#allocation2 + $0x108] sm:$0xff] %v789
  %854 = vst [vmem:[#allocation2 + $0x110] sm:$0xff] %v790
  %855 = vst [vmem:[#allocation2 + $0x118] sm:$0xff] %v791
  %856 = vst [vmem:[#allocation2 + $0x120] sm:$0xff] %v792
  %857 = vst [vmem:[#allocation2 + $0x128] sm:$0xff] %v793
  %858 = vst [vmem:[#allocation2 + $0x130] sm:$0xff] %v794
  %859 = vst [vmem:[#allocation2 + $0x138] sm:$0xff] %v795
  %860 = vst [vmem:[#allocation2 + $0x140] sm:$0xff] %v796
  %861 = vst [vmem:[#allocation2 + $0x148] sm:$0xff] %v797
  %862 = vst [vmem:[#allocation2 + $0x150] sm:$0xff] %v798
  %863 = vst [vmem:[#allocation2 + $0x158] sm:$0xff] %v799
  %864 = vst [vmem:[#allocation2 + $0x160] sm:$0xff] %v800
  %865 = vst [vmem:[#allocation2 + $0x168] sm:$0xff] %v801
  %866 = vst [vmem:[#allocation2 + $0x170] sm:$0xff] %v802
  %867 = vst [vmem:[#allocation2 + $0x178] sm:$0xff] %v803
  %868 = vst [vmem:[#allocation2 + $0x180] sm:$0xff] %v804
  %869 = vst [vmem:[#allocation2 + $0x188] sm:$0xff] %v805
  %870 = vst [vmem:[#allocation2 + $0x190] sm:$0xff] %v806
  %871 = vst [vmem:[#allocation2 + $0x198] sm:$0xff] %v807
  %872 = vst [vmem:[#allocation2 + $0x1a0] sm:$0xff] %v808
  %873 = vst [vmem:[#allocation2 + $0x1a8] sm:$0xff] %v809
  %874 = vst [vmem:[#allocation2 + $0x1b0] sm:$0xff] %v810
  %875 = vst [vmem:[#allocation2 + $0x1b8] sm:$0xff] %v811
  %876 = vst [vmem:[#allocation2 + $0x1c0] sm:$0xff] %v812
  %877 = vst [vmem:[#allocation2 + $0x1c8] sm:$0xff] %v813
  %878 = vst [vmem:[#allocation2 + $0x1d0] sm:$0xff] %v814
  %879 = vst [vmem:[#allocation2 + $0x1d8] sm:$0xff] %v815
  %880 = vst [vmem:[#allocation2 + $0x1e0] sm:$0xff] %v816
  %881 = vst [vmem:[#allocation2 + $0x1e8] sm:$0xff] %v817
  %882 = vst [vmem:[#allocation2 + $0x1f0] sm:$0xff] %v818
  %883 = vst [vmem:[#allocation2 + $0x1f8] sm:$0xff] %v819
  // Predicated region
  $region18: #{cnn_block.1} parent=0 // pred_check
    %p884 = pneg %p15
  $region19: #{cnn_block.1} parent=0 // pred_check_branch
    %886 = sbr.rel (%p884) target = $region21
  $region20: #{cnn_block.1} parent=0 // pred_region
    %v887 = vld [vmem:[#allocation2] sm:$0xff]
    %v888 = vld [vmem:[#allocation2 + $0x8] sm:$0xff]
    %v889 = vld [vmem:[#allocation2 + $0x10] sm:$0xff]
    %v890 = vld [vmem:[#allocation2 + $0x18] sm:$0xff]
    %v891 = vld [vmem:[#allocation2 + $0x20] sm:$0xff]
    %v892 = vld [vmem:[#allocation2 + $0x28] sm:$0xff]
    %v893 = vld [vmem:[#allocation2 + $0x30] sm:$0xff]
    %v894 = vld [vmem:[#allocation2 + $0x38] sm:$0xff]
    %v895 = vld [vmem:[#allocation2 + $0x40] sm:$0xff]
    %v896 = vld [vmem:[#allocation2 + $0x48] sm:$0xff]
    %v897 = vld [vmem:[#allocation2 + $0x50] sm:$0xff]
    %v898 = vld [vmem:[#allocation2 + $0x58] sm:$0xff]
    %v899 = vld [vmem:[#allocation2 + $0x60] sm:$0xff]
    %v900 = vld [vmem:[#allocation2 + $0x68] sm:$0xff]
    %v901 = vld [vmem:[#allocation2 + $0x70] sm:$0xff]
    %v902 = vld [vmem:[#allocation2 + $0x78] sm:$0xff]
    %v903 = vld [vmem:[#allocation2 + $0x80] sm:$0xff]
    %v904 = vld [vmem:[#allocation2 + $0x88] sm:$0xff]
    %v905 = vld [vmem:[#allocation2 + $0x90] sm:$0xff]
    %v906 = vld [vmem:[#allocation2 + $0x98] sm:$0xff]
    %v907 = vld [vmem:[#allocation2 + $0xa0] sm:$0xff]
    %v908 = vld [vmem:[#allocation2 + $0xa8] sm:$0xff]
    %v909 = vld [vmem:[#allocation2 + $0xb0] sm:$0xff]
    %v910 = vld [vmem:[#allocation2 + $0xb8] sm:$0xff]
    %v911 = vld [vmem:[#allocation2 + $0xc0] sm:$0xff]
    %v912 = vld [vmem:[#allocation2 + $0xc8] sm:$0xff]
    %v913 = vld [vmem:[#allocation2 + $0xd0] sm:$0xff]
    %v914 = vld [vmem:[#allocation2 + $0xd8] sm:$0xff]
    %v915 = vld [vmem:[#allocation2 + $0xe0] sm:$0xff]
    %v916 = vld [vmem:[#allocation2 + $0xe8] sm:$0xff]
    %v917 = vld [vmem:[#allocation2 + $0xf0] sm:$0xff]
    %v918 = vld [vmem:[#allocation2 + $0xf8] sm:$0xff]
    %v919 = vld [vmem:[#allocation2 + $0x100] sm:$0xff]
    %v920 = vld [vmem:[#allocation2 + $0x108] sm:$0xff]
    %v921 = vld [vmem:[#allocation2 + $0x110] sm:$0xff]
    %v922 = vld [vmem:[#allocation2 + $0x118] sm:$0xff]
    %v923 = vld [vmem:[#allocation2 + $0x120] sm:$0xff]
    %v924 = vld [vmem:[#allocation2 + $0x128] sm:$0xff]
    %v925 = vld [vmem:[#allocation2 + $0x130] sm:$0xff]
    %v926 = vld [vmem:[#allocation2 + $0x138] sm:$0xff]
    %v927 = vld [vmem:[#allocation2 + $0x140] sm:$0xff]
    %v928 = vld [vmem:[#allocation2 + $0x148] sm:$0xff]
    %v929 = vld [vmem:[#allocation2 + $0x150] sm:$0xff]
    %v930 = vld [vmem:[#allocation2 + $0x158] sm:$0xff]
    %v931 = vld [vmem:[#allocation2 + $0x160] sm:$0xff]
    %v932 = vld [vmem:[#allocation2 + $0x168] sm:$0xff]
    %v933 = vld [vmem:[#allocation2 + $0x170] sm:$0xff]
    %v934 = vld [vmem:[#allocation2 + $0x178] sm:$0xff]
    %v935 = vld [vmem:[#allocation2 + $0x180] sm:$0xff]
    %v936 = vld [vmem:[#allocation2 + $0x188] sm:$0xff]
    %v937 = vld [vmem:[#allocation2 + $0x190] sm:$0xff]
    %v938 = vld [vmem:[#allocation2 + $0x198] sm:$0xff]
    %v939 = vld [vmem:[#allocation2 + $0x1a0] sm:$0xff]
    %v940 = vld [vmem:[#allocation2 + $0x1a8] sm:$0xff]
    %v941 = vld [vmem:[#allocation2 + $0x1b0] sm:$0xff]
    %v942 = vld [vmem:[#allocation2 + $0x1b8] sm:$0xff]
    %v943 = vld [vmem:[#allocation2 + $0x1c0] sm:$0xff]
    %v944 = vld [vmem:[#allocation2 + $0x1c8] sm:$0xff]
    %v945 = vld [vmem:[#allocation2 + $0x1d0] sm:$0xff]
    %v946 = vld [vmem:[#allocation2 + $0x1d8] sm:$0xff]
    %v947 = vld [vmem:[#allocation2 + $0x1e0] sm:$0xff]
    %v948 = vld [vmem:[#allocation2 + $0x1e8] sm:$0xff]
    %v949 = vld [vmem:[#allocation2 + $0x1f0] sm:$0xff]
    %v950 = vld [vmem:[#allocation2 + $0x1f8] sm:$0xff]
    %v951 = vld [vmem:[%s2] sm:$0x1]
    %v953 = vlaneseq
    %v954 = vshrl.u32 %v953, 7
    %v955 = vsub.s32 0, %v954
    %v956 = vrot.slane %v951, %v955
    %v958 = vadd.f32 %v887, %v956
    %v959 = vadd.f32 %v888, %v956
    %v960 = vadd.f32 %v889, %v956
    %v961 = vadd.f32 %v890, %v956
    %v962 = vadd.f32 %v891, %v956
    %v963 = vadd.f32 %v892, %v956
    %v964 = vadd.f32 %v893, %v956
    %v965 = vadd.f32 %v894, %v956
    %v966 = vadd.f32 %v895, %v956
    %v967 = vadd.f32 %v896, %v956
    %v968 = vadd.f32 %v897, %v956
    %v969 = vadd.f32 %v898, %v956
    %v970 = vadd.f32 %v899, %v956
    %v971 = vadd.f32 %v900, %v956
    %v972 = vadd.f32 %v901, %v956
    %v973 = vadd.f32 %v902, %v956
    %v974 = vadd.f32 %v903, %v956
    %v975 = vadd.f32 %v904, %v956
    %v976 = vadd.f32 %v905, %v956
    %v977 = vadd.f32 %v906, %v956
    %v978 = vadd.f32 %v907, %v956
    %v979 = vadd.f32 %v908, %v956
    %v980 = vadd.f32 %v909, %v956
    %v981 = vadd.f32 %v910, %v956
    %v982 = vadd.f32 %v911, %v956
    %v983 = vadd.f32 %v912, %v956
    %v984 = vadd.f32 %v913, %v956
    %v985 = vadd.f32 %v914, %v956
    %v986 = vadd.f32 %v915, %v956
    %v987 = vadd.f32 %v916, %v956
    %v988 = vadd.f32 %v917, %v956
    %v989 = vadd.f32 %v918, %v956
    %v990 = vadd.f32 %v919, %v956
    %v991 = vadd.f32 %v920, %v956
    %v992 = vadd.f32 %v921, %v956
    %v993 = vadd.f32 %v922, %v956
    %v994 = vadd.f32 %v923, %v956
    %v995 = vadd.f32 %v924, %v956
    %v996 = vadd.f32 %v925, %v956
    %v997 = vadd.f32 %v926, %v956
    %v998 = vadd.f32 %v927, %v956
    %v999 = vadd.f32 %v928, %v956
    %v1000 = vadd.f32 %v929, %v956
    %v1001 = vadd.f32 %v930, %v956
    %v1002 = vadd.f32 %v931, %v956
    %v1003 = vadd.f32 %v932, %v956
    %v1004 = vadd.f32 %v933, %v956
    %v1005 = vadd.f32 %v934, %v956
    %v1006 = vadd.f32 %v935, %v956
    %v1007 = vadd.f32 %v936, %v956
    %v1008 = vadd.f32 %v937, %v956
    %v1009 = vadd.f32 %v938, %v956
    %v1010 = vadd.f32 %v939, %v956
    %v1011 = vadd.f32 %v940, %v956
    %v1012 = vadd.f32 %v941, %v956
    %v1013 = vadd.f32 %v942, %v956
    %v1014 = vadd.f32 %v943, %v956
    %v1015 = vadd.f32 %v944, %v956
    %v1016 = vadd.f32 %v945, %v956
    %v1017 = vadd.f32 %v946, %v956
    %v1018 = vadd.f32 %v947, %v956
    %v1019 = vadd.f32 %v948, %v956
    %v1020 = vadd.f32 %v949, %v956
    %v1021 = vadd.f32 %v950, %v956
    %v1022 = vmul.f32 %v958, 0.1
    %v1023 = vmul.f32 %v959, 0.1
    %v1024 = vmul.f32 %v960, 0.1
    %v1025 = vmul.f32 %v961, 0.1
    %v1026 = vmul.f32 %v962, 0.1
    %v1027 = vmul.f32 %v963, 0.1
    %v1028 = vmul.f32 %v964, 0.1
    %v1029 = vmul.f32 %v965, 0.1
    %v1030 = vmul.f32 %v966, 0.1
    %v1031 = vmul.f32 %v967, 0.1
    %v1032 = vmul.f32 %v968, 0.1
    %v1033 = vmul.f32 %v969, 0.1
    %v1034 = vmul.f32 %v970, 0.1
    %v1035 = vmul.f32 %v971, 0.1
    %v1036 = vmul.f32 %v972, 0.1
    %v1037 = vmul.f32 %v973, 0.1
    %v1038 = vmul.f32 %v974, 0.1
    %v1039 = vmul.f32 %v975, 0.1
    %v1040 = vmul.f32 %v976, 0.1
    %v1041 = vmul.f32 %v977, 0.1
    %v1042 = vmul.f32 %v978, 0.1
    %v1043 = vmul.f32 %v979, 0.1
    %v1044 = vmul.f32 %v980, 0.1
    %v1045 = vmul.f32 %v981, 0.1
    %v1046 = vmul.f32 %v982, 0.1
    %v1047 = vmul.f32 %v983, 0.1
    %v1048 = vmul.f32 %v984, 0.1
    %v1049 = vmul.f32 %v985, 0.1
    %v1050 = vmul.f32 %v986, 0.1
    %v1051 = vmul.f32 %v987, 0.1
    %v1052 = vmul.f32 %v988, 0.1
    %v1053 = vmul.f32 %v989, 0.1
    %v1054 = vmul.f32 %v990, 0.1
    %v1055 = vmul.f32 %v991, 0.1
    %v1056 = vmul.f32 %v992, 0.1
    %v1057 = vmul.f32 %v993, 0.1
    %v1058 = vmul.f32 %v994, 0.1
    %v1059 = vmul.f32 %v995, 0.1
    %v1060 = vmul.f32 %v996, 0.1
    %v1061 = vmul.f32 %v997, 0.1
    %v1062 = vmul.f32 %v998, 0.1
    %v1063 = vmul.f32 %v999, 0.1
    %v1064 = vmul.f32 %v1000, 0.1
    %v1065 = vmul.f32 %v1001, 0.1
    %v1066 = vmul.f32 %v1002, 0.1
    %v1067 = vmul.f32 %v1003, 0.1
    %v1068 = vmul.f32 %v1004, 0.1
    %v1069 = vmul.f32 %v1005, 0.1
    %v1070 = vmul.f32 %v1006, 0.1
    %v1071 = vmul.f32 %v1007, 0.1
    %v1072 = vmul.f32 %v1008, 0.1
    %v1073 = vmul.f32 %v1009, 0.1
    %v1074 = vmul.f32 %v1010, 0.1
    %v1075 = vmul.f32 %v1011, 0.1
    %v1076 = vmul.f32 %v1012, 0.1
    %v1077 = vmul.f32 %v1013, 0.1
    %v1078 = vmul.f32 %v1014, 0.1
    %v1079 = vmul.f32 %v1015, 0.1
    %v1080 = vmul.f32 %v1016, 0.1
    %v1081 = vmul.f32 %v1017, 0.1
    %v1082 = vmul.f32 %v1018, 0.1
    %v1083 = vmul.f32 %v1019, 0.1
    %v1084 = vmul.f32 %v1020, 0.1
    %v1085 = vmul.f32 %v1021, 0.1
    %v1086 = vmax.f32 %v958, %v1022
    %v1087 = vmax.f32 %v959, %v1023
    %v1088 = vmax.f32 %v960, %v1024
    %v1089 = vmax.f32 %v961, %v1025
    %v1090 = vmax.f32 %v962, %v1026
    %v1091 = vmax.f32 %v963, %v1027
    %v1092 = vmax.f32 %v964, %v1028
    %v1093 = vmax.f32 %v965, %v1029
    %v1094 = vmax.f32 %v966, %v1030
    %v1095 = vmax.f32 %v967, %v1031
    %v1096 = vmax.f32 %v968, %v1032
    %v1097 = vmax.f32 %v969, %v1033
    %v1098 = vmax.f32 %v970, %v1034
    %v1099 = vmax.f32 %v971, %v1035
    %v1100 = vmax.f32 %v972, %v1036
    %v1101 = vmax.f32 %v973, %v1037
    %v1102 = vmax.f32 %v974, %v1038
    %v1103 = vmax.f32 %v975, %v1039
    %v1104 = vmax.f32 %v976, %v1040
    %v1105 = vmax.f32 %v977, %v1041
    %v1106 = vmax.f32 %v978, %v1042
    %v1107 = vmax.f32 %v979, %v1043
    %v1108 = vmax.f32 %v980, %v1044
    %v1109 = vmax.f32 %v981, %v1045
    %v1110 = vmax.f32 %v982, %v1046
    %v1111 = vmax.f32 %v983, %v1047
    %v1112 = vmax.f32 %v984, %v1048
    %v1113 = vmax.f32 %v985, %v1049
    %v1114 = vmax.f32 %v986, %v1050
    %v1115 = vmax.f32 %v987, %v1051
    %v1116 = vmax.f32 %v988, %v1052
    %v1117 = vmax.f32 %v989, %v1053
    %v1118 = vmax.f32 %v990, %v1054
    %v1119 = vmax.f32 %v991, %v1055
    %v1120 = vmax.f32 %v992, %v1056
    %v1121 = vmax.f32 %v993, %v1057
    %v1122 = vmax.f32 %v994, %v1058
    %v1123 = vmax.f32 %v995, %v1059
    %v1124 = vmax.f32 %v996, %v1060
    %v1125 = vmax.f32 %v997, %v1061
    %v1126 = vmax.f32 %v998, %v1062
    %v1127 = vmax.f32 %v999, %v1063
    %v1128 = vmax.f32 %v1000, %v1064
    %v1129 = vmax.f32 %v1001, %v1065
    %v1130 = vmax.f32 %v1002, %v1066
    %v1131 = vmax.f32 %v1003, %v1067
    %v1132 = vmax.f32 %v1004, %v1068
    %v1133 = vmax.f32 %v1005, %v1069
    %v1134 = vmax.f32 %v1006, %v1070
    %v1135 = vmax.f32 %v1007, %v1071
    %v1136 = vmax.f32 %v1008, %v1072
    %v1137 = vmax.f32 %v1009, %v1073
    %v1138 = vmax.f32 %v1010, %v1074
    %v1139 = vmax.f32 %v1011, %v1075
    %v1140 = vmax.f32 %v1012, %v1076
    %v1141 = vmax.f32 %v1013, %v1077
    %v1142 = vmax.f32 %v1014, %v1078
    %v1143 = vmax.f32 %v1015, %v1079
    %v1144 = vmax.f32 %v1016, %v1080
    %v1145 = vmax.f32 %v1017, %v1081
    %v1146 = vmax.f32 %v1018, %v1082
    %v1147 = vmax.f32 %v1019, %v1083
    %v1148 = vmax.f32 %v1020, %v1084
    %v1149 = vmax.f32 %v1021, %v1085
    %1150 = vst [vmem:[%s3] sm:$0xff] %v1086
    %1151 = vst [vmem:[%s3 + $0x8] sm:$0xff] %v1087
    %1152 = vst [vmem:[%s3 + $0x10] sm:$0xff] %v1088
    %1153 = vst [vmem:[%s3 + $0x18] sm:$0xff] %v1089
    %1154 = vst [vmem:[%s3 + $0x20] sm:$0xff] %v1090
    %1155 = vst [vmem:[%s3 + $0x28] sm:$0xff] %v1091
    %1156 = vst [vmem:[%s3 + $0x30] sm:$0xff] %v1092
    %1157 = vst [vmem:[%s3 + $0x38] sm:$0xff] %v1093
    %1158 = vst [vmem:[%s3 + $0x40] sm:$0xff] %v1094
    %1159 = vst [vmem:[%s3 + $0x48] sm:$0xff] %v1095
    %1160 = vst [vmem:[%s3 + $0x50] sm:$0xff] %v1096
    %1161 = vst [vmem:[%s3 + $0x58] sm:$0xff] %v1097
    %1162 = vst [vmem:[%s3 + $0x60] sm:$0xff] %v1098
    %1163 = vst [vmem:[%s3 + $0x68] sm:$0xff] %v1099
    %1164 = vst [vmem:[%s3 + $0x70] sm:$0xff] %v1100
    %1165 = vst [vmem:[%s3 + $0x78] sm:$0xff] %v1101
    %1166 = vst [vmem:[%s3 + $0x80] sm:$0xff] %v1102
    %1167 = vst [vmem:[%s3 + $0x88] sm:$0xff] %v1103
    %1168 = vst [vmem:[%s3 + $0x90] sm:$0xff] %v1104
    %1169 = vst [vmem:[%s3 + $0x98] sm:$0xff] %v1105
    %1170 = vst [vmem:[%s3 + $0xa0] sm:$0xff] %v1106
    %1171 = vst [vmem:[%s3 + $0xa8] sm:$0xff] %v1107
    %1172 = vst [vmem:[%s3 + $0xb0] sm:$0xff] %v1108
    %1173 = vst [vmem:[%s3 + $0xb8] sm:$0xff] %v1109
    %1174 = vst [vmem:[%s3 + $0xc0] sm:$0xff] %v1110
    %1175 = vst [vmem:[%s3 + $0xc8] sm:$0xff] %v1111
    %1176 = vst [vmem:[%s3 + $0xd0] sm:$0xff] %v1112
    %1177 = vst [vmem:[%s3 + $0xd8] sm:$0xff] %v1113
    %1178 = vst [vmem:[%s3 + $0xe0] sm:$0xff] %v1114
    %1179 = vst [vmem:[%s3 + $0xe8] sm:$0xff] %v1115
    %1180 = vst [vmem:[%s3 + $0xf0] sm:$0xff] %v1116
    %1181 = vst [vmem:[%s3 + $0xf8] sm:$0xff] %v1117
    %1182 = vst [vmem:[%s3 + $0x100] sm:$0xff] %v1118
    %1183 = vst [vmem:[%s3 + $0x108] sm:$0xff] %v1119
    %1184 = vst [vmem:[%s3 + $0x110] sm:$0xff] %v1120
    %1185 = vst [vmem:[%s3 + $0x118] sm:$0xff] %v1121
    %1186 = vst [vmem:[%s3 + $0x120] sm:$0xff] %v1122
    %1187 = vst [vmem:[%s3 + $0x128] sm:$0xff] %v1123
    %1188 = vst [vmem:[%s3 + $0x130] sm:$0xff] %v1124
    %1189 = vst [vmem:[%s3 + $0x138] sm:$0xff] %v1125
    %1190 = vst [vmem:[%s3 + $0x140] sm:$0xff] %v1126
    %1191 = vst [vmem:[%s3 + $0x148] sm:$0xff] %v1127
    %1192 = vst [vmem:[%s3 + $0x150] sm:$0xff] %v1128
    %1193 = vst [vmem:[%s3 + $0x158] sm:$0xff] %v1129
    %1194 = vst [vmem:[%s3 + $0x160] sm:$0xff] %v1130
    %1195 = vst [vmem:[%s3 + $0x168] sm:$0xff] %v1131
    %1196 = vst [vmem:[%s3 + $0x170] sm:$0xff] %v1132
    %1197 = vst [vmem:[%s3 + $0x178] sm:$0xff] %v1133
    %1198 = vst [vmem:[%s3 + $0x180] sm:$0xff] %v1134
    %1199 = vst [vmem:[%s3 + $0x188] sm:$0xff] %v1135
    %1200 = vst [vmem:[%s3 + $0x190] sm:$0xff] %v1136
    %1201 = vst [vmem:[%s3 + $0x198] sm:$0xff] %v1137
    %1202 = vst [vmem:[%s3 + $0x1a0] sm:$0xff] %v1138
    %1203 = vst [vmem:[%s3 + $0x1a8] sm:$0xff] %v1139
    %1204 = vst [vmem:[%s3 + $0x1b0] sm:$0xff] %v1140
    %1205 = vst [vmem:[%s3 + $0x1b8] sm:$0xff] %v1141
    %1206 = vst [vmem:[%s3 + $0x1c0] sm:$0xff] %v1142
    %1207 = vst [vmem:[%s3 + $0x1c8] sm:$0xff] %v1143
    %1208 = vst [vmem:[%s3 + $0x1d0] sm:$0xff] %v1144
    %1209 = vst [vmem:[%s3 + $0x1d8] sm:$0xff] %v1145
    %1210 = vst [vmem:[%s3 + $0x1e0] sm:$0xff] %v1146
    %1211 = vst [vmem:[%s3 + $0x1e8] sm:$0xff] %v1147
    %1212 = vst [vmem:[%s3 + $0x1f0] sm:$0xff] %v1148
    %1213 = vst [vmem:[%s3 + $0x1f8] sm:$0xff] %v1149
  $region21: #{cnn_block.1} parent=0 // pred_fallthru
    _
  // Predicated region
  $region22: #{cnn_block.1} parent=0 // pred_check
    _
  $region23: #{cnn_block.1} parent=0 // pred_check_branch
    %1215 = sbr.rel (0) target = $region25
  $region24: #{cnn_block.1} parent=0 // pred_region
    _
  $region25: #{cnn_block.1} parent=0 // pred_fallthru
    _
  // Predicated region
  $region26: #{cnn_block.1} parent=0 // pred_check
    _
  $region27: #{cnn_block.1} parent=0 // pred_check_branch
    %1217 = sbr.rel (0) target = $region29
  $region28: #{cnn_block.1} parent=0 // pred_region
    _
  $region29: #{cnn_block.1} parent=0 // pred_fallthru
    _

</llo_original>
